<compile_context>
chip_gen: v7x
topology: tpu7x:2x2x1
jax: 0.10.0
libtpu: 0.0.40
codegen_flags: <defaults>
</compile_context>

<pallas_src>
import functools

import jax
import jax.numpy as jnp
from jax.experimental import pallas as pl
from jax.experimental.pallas import tpu as pltpu


def _round_up(v, m):
    return ((v + m - 1) // m) * m


def _ilp_sum(vals, n_acc=4):
    """Round-robin accumulation into up to n_acc independent chains + pairwise combine.

    Exposes ILP to the 4 VALU slots instead of one long dependent add chain, and keeps
    only ~n_acc + 1 full-width values live at a time.
    """
    accs = list(vals[:n_acc])
    n = len(accs)
    for i in range(n, len(vals)):
        accs[i % n] = accs[i % n] + vals[i]
    while len(accs) > 1:
        nxt = [accs[i] + accs[i + 1] for i in range(0, len(accs) - 1, 2)]
        if len(accs) % 2:
            nxt.append(accs[-1])
        accs = nxt
    return accs[0]


def _decomp_kernel(x_ref, res_ref, mean_ref, xpad_ref, s_ref, *,
                   kernel_size, seq_len, n_ch, pad, base, fa, fb):
    """x_ref/res_ref/mean_ref: (Bt, L*C); xpad_ref: (Bt, >= base + (L+pad)*C) scratch.

    Padded time position p (0 <= p < L + 2*pad) lives at scratch lane xoff + p*C with
    xoff = base - pad*C; `base` is pad*C rounded up to 128 so the bulk store of x (and
    the front-pad fill, when C | base) are lane-aligned.
    """
    lc = seq_len * n_ch
    k = kernel_size
    sdt = xpad_ref.dtype
    xoff = base - pad * n_ch

    # ---- stitch the replicate-padded series into VMEM (no padded HBM copy) ----------
    xpad_ref[:, pl.ds(base, lc)] = x_ref[...].astype(sdt)       # lane-aligned bulk store
    if pad > 0:
        first = x_ref[:, pl.ds(0, n_ch)].astype(sdt)            # x[:, 0, :]
        last = x_ref[:, pl.ds(lc - n_ch, n_ch)].astype(sdt)     # x[:, L-1, :]
        # One wide store per side.  The front fill extends left into the 128-lane
        # alignment slack (never read), so it starts at lane 0 whenever C divides base.
        reps_f = base // n_ch if base % n_ch == 0 else pad
        xpad_ref[:, pl.ds(base - reps_f * n_ch, reps_f * n_ch)] = jnp.tile(
            first, (1, reps_f))
        xpad_ref[:, pl.ds(base + lc, pad * n_ch)] = jnp.tile(last, (1, pad))

    # ---- moving sum ------------------------------------------------------------------
    if fa > 0:
        # Factored partial sums: S_a[q] = sum_{j<a} xpad[q+j]  (q in [0, L+(b-1)*a)),
        # then k*mean[t] = sum_{i<b} S_a[t + i*a] + sum_{j<r} xpad[t + a*b + j].
        fr = k - fa * fb
        qc = (seq_len + (fb - 1) * fa) * n_ch
        s_ref[:, pl.ds(0, qc)] = _ilp_sum(
            [xpad_ref[:, pl.ds(xoff + j * n_ch, qc)].astype(jnp.float32)
             for j in range(fa)])
        terms = [s_ref[:, pl.ds(i * fa * n_ch, lc)] for i in range(fb)]
        terms += [xpad_ref[:, pl.ds(xoff + (fa * fb + j) * n_ch, lc)].astype(jnp.float32)
                  for j in range(fr)]
    else:
        # Small k: direct shifted-slice sum (still tree/ILP accumulated).
        terms = [xpad_ref[:, pl.ds(xoff + j * n_ch, lc)].astype(jnp.float32)
                 for j in range(k)]
    mean = _ilp_sum(terms) * jnp.float32(1.0 / k)

    mean_ref[...] = mean.astype(mean_ref.dtype)
    # res = x - mean: reload the lane-aligned center slice (== x exactly) instead of
    # keeping an x copy live across the whole reduction.
    res_ref[...] = (xpad_ref[:, pl.ds(base, lc)].astype(jnp.float32) - mean
                    ).astype(res_ref.dtype)


def _hw_params():
    """Generation-aware (budget_per_block, vmem_limit_bytes, force_split)."""
    vmem_cap = None
    try:
        vmem_cap = getattr(pltpu.get_tpu_info(), "vmem_capacity_bytes", None)
    except Exception:
        vmem_cap = None
    if vmem_cap is not None and vmem_cap >= 96 * 1024 * 1024:
        # 128 MiB VMEM parts (v5e / v6e): single TensorCore -> big blocks, no split.
        return 24 * 1024 * 1024, 64 * 1024 * 1024, False
    # 64 MiB VMEM / dual-TensorCore parts (v7x) or unknown: conservative blocks, and
    # guarantee a >= 2-step "parallel" grid so both cores get work.
    return 8 * 1024 * 1024, 32 * 1024 * 1024, True


def _batch_tile(batch, per_row, sub, budget, force_split):
    bt = budget // max(per_row, 1)
    if bt >= batch:
        if force_split and batch >= 2 * sub:
            # Split into >= 2 blocks (multiples of the sublane packing) for dual-core.
            return max(sub, ((batch // 2) // sub) * sub)
        return batch                         # whole batch, single block (single-TC parts)
    if batch <= sub:
        return batch                         # block == full dim is always layout-legal
    # TODO(synk): add an L*C halo-tiling path for huge L*C where even bt=sub blows the
    # VMEM budget; batch-only tiling is kept here.
    return max(sub, (bt // sub) * sub)


def series_decomp(x, kernel_size):
    """x: [B, L, C] array.  Returns (res, moving_mean), both [B, L, C], dtype of x."""
    if kernel_size < 1 or kernel_size % 2 != 1:
        raise ValueError(
            "series_decomp requires an odd kernel_size >= 1 (an even kernel changes "
            "the output length of the underlying AvgPool1d).")
    B, L, C = x.shape
    pad = (kernel_size - 1) // 2
    lc = L * C
    base = _round_up(pad * C, 128)            # lane-aligned start of x inside the scratch
    w_pad = _round_up(base + lc + pad * C, 128)

    # Factored partial-sum split k -> a*b + r with a ~ sqrt(k) (only worth it for k>=9).
    if kernel_size >= 9:
        fa = max(2, int(round(kernel_size ** 0.5)))
        fb = kernel_size // fa
        w_s = _round_up((L + (fb - 1) * fa) * C, 128)
    else:
        fa, fb = 0, 0
        w_s = 128                              # tiny unused dummy scratch

    # Scratch in the input dtype when it is bf16/f32 (halves scratch + load bytes for
    # bf16); accumulation is always f32.
    sdt = x.dtype if x.dtype in (jnp.dtype(jnp.bfloat16), jnp.dtype(jnp.float32)) \
        else jnp.dtype(jnp.float32)
    sub = {4: 8, 2: 16, 1: 32}.get(jnp.dtype(x.dtype).itemsize, 8)

    budget, vmem_limit, force_split = _hw_params()
    # Per-row VMEM estimate: double-buffered input + 2 double-buffered outputs +
    # padded scratch + partial-sum scratch + live f32 accumulators.
    per_row = (6 * lc * jnp.dtype(x.dtype).itemsize
               + w_pad * jnp.dtype(sdt).itemsize + w_s * 4 + 6 * lc * 4)
    bt = _batch_tile(B, per_row, sub, budget, force_split)
    grid = (pl.cdiv(B, bt),)

    xf = x.reshape(B, lc)                      # metadata-only fold -> lane-dense layout

    kernel = functools.partial(
        _decomp_kernel, kernel_size=kernel_size, seq_len=L, n_ch=C, pad=pad,
        base=base, fa=fa, fb=fb)

    res, mean = pl.pallas_call(
        kernel,
        out_shape=(
            jax.ShapeDtypeStruct((B, lc), x.dtype),
            jax.ShapeDtypeStruct((B, lc), x.dtype),
        ),
        grid_spec=pltpu.PrefetchScalarGridSpec(
            num_scalar_prefetch=0,
            grid=grid,
            in_specs=[pl.BlockSpec((bt, lc), lambda i: (i, 0))],
            out_specs=[
                pl.BlockSpec((bt, lc), lambda i: (i, 0)),
                pl.BlockSpec((bt, lc), lambda i: (i, 0)),
            ],
            scratch_shapes=[
                pltpu.VMEM((bt, w_pad), sdt),
                pltpu.VMEM((bt, w_s), jnp.float32),
            ],
        ),
        compiler_params=pltpu.CompilerParams(
            dimension_semantics=("parallel",),
            vmem_limit_bytes=vmem_limit,
        ),
    )(xf)
    return res.reshape(B, L, C), mean.reshape(B, L, C)


def _reference(x, kernel_size):
    # Pure-JAX mirror of the PyTorch forward (moving_avg + series_decomp).
    pad = (kernel_size - 1) // 2
    front = jnp.repeat(x[:, 0:1, :], pad, axis=1)
    end = jnp.repeat(x[:, -1:, :], pad, axis=1)
    xpad = jnp.concatenate([front, x, end], axis=1)
    L = x.shape[1]
    windows = jnp.stack([xpad[:, j:j + L, :] for j in range(kernel_size)], axis=0)
    mean = jnp.mean(windows, axis=0)
    return x - mean, mean


if __name__ == "__main__":
    # UMixer-style sizes, kept small: batch 16, seq_len 96, 8 variates, window 25.
    kernel_size = 25
    B, L, C = 16, 96, 8

    key = jax.random.PRNGKey(0)
    x = jax.random.normal(key, (B, L, C), dtype=jnp.float32)

    res, mean = series_decomp(x, kernel_size)
    jax.block_until_ready((res, mean))

    res_ref, mean_ref = _reference(x, kernel_size)
    assert res.shape == (B, L, C) and mean.shape == (B, L, C)
    assert jnp.allclose(mean, mean_ref, atol=1e-5, rtol=1e-5)
    assert jnp.allclose(res, res_ref, atol=1e-5, rtol=1e-5)

    print("KERNEL_OK")
</pallas_src>

<mosaic_0001>
module attributes {stable_mosaic.version = 11 : i64} {
  func.func @_decomp_kernel(%arg0: i32, %arg1: memref<8x768xf32, #tpu.memory_space<vmem>>, %arg2: memref<8x768xf32, #tpu.memory_space<vmem>>, %arg3: memref<8x768xf32, #tpu.memory_space<vmem>>, %arg4: memref<8x1024xf32, #tpu.memory_space<vmem>>, %arg5: memref<8x1024xf32, #tpu.memory_space<vmem>>) attributes {dimension_semantics = [#tpu.dimension_semantics<parallel>], iteration_bounds = array<i64: 2>, scalar_prefetch = 0 : i64, scratch_operands = 2 : i64, tpu.core_type = #tpu.core_type<tc>, window_params = [{transform_indices = @transform_0, window_bounds = array<i64: 8, 768>}, {transform_indices = @transform_1, window_bounds = array<i64: 8, 768>}, {transform_indices = @transform_2, window_bounds = array<i64: 8, 768>}]} {
    %c0 = arith.constant 0 : index
    %c0_0 = arith.constant 0 : index
    %0 = vector.load %arg1[%c0, %c0_0] : memref<8x768xf32, #tpu.memory_space<vmem>>, vector<8x768xf32>
    %c0_1 = arith.constant 0 : index
    %c128 = arith.constant 128 : index
    %1 = vector.load %arg4[%c0_1, %c128] : memref<8x1024xf32, #tpu.memory_space<vmem>>, vector<8x768xf32>
    tpu.vector_store %arg4[%c0_1, %c128], %0 {strides = array<i32>} : memref<8x1024xf32, #tpu.memory_space<vmem>>, vector<8x768xf32>,
    %c0_2 = arith.constant 0 : index
    %c0_3 = arith.constant 0 : index
    %2 = vector.load %arg1[%c0_2, %c0_3] : memref<8x768xf32, #tpu.memory_space<vmem>>, vector<8x8xf32>
    %c0_4 = arith.constant 0 : index
    %c760 = arith.constant 760 : index
    %3 = vector.load %arg1[%c0_4, %c760] : memref<8x768xf32, #tpu.memory_space<vmem>>, vector<8x8xf32>
    %4 = tpu.concatenate %2, %2, %2, %2, %2, %2, %2, %2, %2, %2, %2, %2, %2, %2, %2, %2 in 1 : vector<8x8xf32>, vector<8x8xf32>, vector<8x8xf32>, vector<8x8xf32>, vector<8x8xf32>, vector<8x8xf32>, vector<8x8xf32>, vector<8x8xf32>, vector<8x8xf32>, vector<8x8xf32>, vector<8x8xf32>, vector<8x8xf32>, vector<8x8xf32>, vector<8x8xf32>, vector<8x8xf32>, vector<8x8xf32> -> vector<8x128xf32>
    %c0_5 = arith.constant 0 : index
    %c0_6 = arith.constant 0 : index
    %5 = vector.load %arg4[%c0_5, %c0_6] : memref<8x1024xf32, #tpu.memory_space<vmem>>, vector<8x128xf32>
    tpu.vector_store %arg4[%c0_5, %c0_6], %4 {strides = array<i32>} : memref<8x1024xf32, #tpu.memory_space<vmem>>, vector<8x128xf32>,
    %6 = tpu.concatenate %3, %3, %3, %3, %3, %3, %3, %3, %3, %3, %3, %3 in 1 : vector<8x8xf32>, vector<8x8xf32>, vector<8x8xf32>, vector<8x8xf32>, vector<8x8xf32>, vector<8x8xf32>, vector<8x8xf32>, vector<8x8xf32>, vector<8x8xf32>, vector<8x8xf32>, vector<8x8xf32>, vector<8x8xf32> -> vector<8x96xf32>
    %c0_7 = arith.constant 0 : index
    %c896 = arith.constant 896 : index
    %7 = vector.load %arg4[%c0_7, %c896] : memref<8x1024xf32, #tpu.memory_space<vmem>>, vector<8x96xf32>
    tpu.vector_store %arg4[%c0_7, %c896], %6 {strides = array<i32>} : memref<8x1024xf32, #tpu.memory_space<vmem>>, vector<8x96xf32>,
    %c0_8 = arith.constant 0 : index
    %c32 = arith.constant 32 : index
    %8 = vector.load %arg4[%c0_8, %c32] : memref<8x1024xf32, #tpu.memory_space<vmem>>, vector<8x928xf32>
    %c0_9 = arith.constant 0 : index
    %c40 = arith.constant 40 : index
    %9 = vector.load %arg4[%c0_9, %c40] : memref<8x1024xf32, #tpu.memory_space<vmem>>, vector<8x928xf32>
    %c0_10 = arith.constant 0 : index
    %c48 = arith.constant 48 : index
    %10 = vector.load %arg4[%c0_10, %c48] : memref<8x1024xf32, #tpu.memory_space<vmem>>, vector<8x928xf32>
    %c0_11 = arith.constant 0 : index
    %c56 = arith.constant 56 : index
    %11 = vector.load %arg4[%c0_11, %c56] : memref<8x1024xf32, #tpu.memory_space<vmem>>, vector<8x928xf32>
    %c0_12 = arith.constant 0 : index
    %c64 = arith.constant 64 : index
    %12 = vector.load %arg4[%c0_12, %c64] : memref<8x1024xf32, #tpu.memory_space<vmem>>, vector<8x928xf32>
    %13 = arith.addf %8, %12 : vector<8x928xf32>
    %14 = arith.addf %13, %9 : vector<8x928xf32>
    %15 = arith.addf %10, %11 : vector<8x928xf32>
    %16 = arith.addf %14, %15 : vector<8x928xf32>
    %c0_13 = arith.constant 0 : index
    %c0_14 = arith.constant 0 : index
    %17 = vector.load %arg5[%c0_13, %c0_14] : memref<8x1024xf32, #tpu.memory_space<vmem>>, vector<8x928xf32>
    tpu.vector_store %arg5[%c0_13, %c0_14], %16 {strides = array<i32>} : memref<8x1024xf32, #tpu.memory_space<vmem>>, vector<8x928xf32>,
    %c0_15 = arith.constant 0 : index
    %c0_16 = arith.constant 0 : index
    %18 = vector.load %arg5[%c0_15, %c0_16] : memref<8x1024xf32, #tpu.memory_space<vmem>>, vector<8x768xf32>
    %c0_17 = arith.constant 0 : index
    %c40_18 = arith.constant 40 : index
    %19 = vector.load %arg5[%c0_17, %c40_18] : memref<8x1024xf32, #tpu.memory_space<vmem>>, vector<8x768xf32>
    %c0_19 = arith.constant 0 : index
    %c80 = arith.constant 80 : index
    %20 = vector.load %arg5[%c0_19, %c80] : memref<8x1024xf32, #tpu.memory_space<vmem>>, vector<8x768xf32>
    %c0_20 = arith.constant 0 : index
    %c120 = arith.constant 120 : index
    %21 = vector.load %arg5[%c0_20, %c120] : memref<8x1024xf32, #tpu.memory_space<vmem>>, vector<8x768xf32>
    %c0_21 = arith.constant 0 : index
    %c160 = arith.constant 160 : index
    %22 = vector.load %arg5[%c0_21, %c160] : memref<8x1024xf32, #tpu.memory_space<vmem>>, vector<8x768xf32>
    %23 = arith.addf %18, %22 : vector<8x768xf32>
    %24 = arith.addf %23, %19 : vector<8x768xf32>
    %25 = arith.addf %20, %21 : vector<8x768xf32>
    %26 = arith.addf %24, %25 : vector<8x768xf32>
    %cst = arith.constant 4.000000e-02 : f32
    %27 = vector.broadcast %cst : f32 to vector<8x768xf32>
    %28 = arith.mulf %26, %27 : vector<8x768xf32>
    %c0_22 = arith.constant 0 : index
    %c0_23 = arith.constant 0 : index
    %29 = vector.load %arg3[%c0_22, %c0_23] : memref<8x768xf32, #tpu.memory_space<vmem>>, vector<8x768xf32>
    tpu.vector_store %arg3[%c0_22, %c0_23], %28 {strides = array<i32>} : memref<8x768xf32, #tpu.memory_space<vmem>>, vector<8x768xf32>,
    %c0_24 = arith.constant 0 : index
    %c128_25 = arith.constant 128 : index
    %30 = vector.load %arg4[%c0_24, %c128_25] : memref<8x1024xf32, #tpu.memory_space<vmem>>, vector<8x768xf32>
    %31 = arith.subf %30, %28 : vector<8x768xf32>
    %c0_26 = arith.constant 0 : index
    %c0_27 = arith.constant 0 : index
    %32 = vector.load %arg2[%c0_26, %c0_27] : memref<8x768xf32, #tpu.memory_space<vmem>>, vector<8x768xf32>
    tpu.vector_store %arg2[%c0_26, %c0_27], %31 {strides = array<i32>} : memref<8x768xf32, #tpu.memory_space<vmem>>, vector<8x768xf32>,
    return
  }
  func.func @transform_0(%arg0: i32) -> (i32, i32) {
    %c0_i32 = arith.constant 0 : i32
    %c0_i32_0 = arith.constant 0 : i32
    return %arg0, %c0_i32 : i32, i32
  }
  func.func @transform_1(%arg0: i32) -> (i32, i32) {
    %c0_i32 = arith.constant 0 : i32
    %c0_i32_0 = arith.constant 0 : i32
    return %arg0, %c0_i32 : i32, i32
  }
  func.func @transform_2(%arg0: i32) -> (i32, i32) {
    %c0_i32 = arith.constant 0 : i32
    %c0_i32_0 = arith.constant 0 : i32
    return %arg0, %c0_i32 : i32, i32
  }
}

</mosaic_0001>

<llo_original>
// kernel: tpu_custom_call.1
$region0: #{tpu_custom_call.1}
  #allocation0 [shape = 'u32[]', space=smem, size = 0x4, offset = 0x4, fixed_abs, tag = 'smem constant byte address 0x4 - core index']
  #allocation1 [shape = 'u32[144,128]{1,0:T(1,128)}', space=vmem, size = 0x12000, scoped, tag = 'internal scratch']
  #allocation2 [shape = 'f32[8,1024]{1,0:T(8,128)}', space=vmem, size = 0x8000, scoped, tag = 'scratch operand']
  #allocation3 [shape = 'f32[8,1024]{1,0:T(8,128)}', space=vmem, size = 0x8000, scoped, tag = 'scratch operand']
  %s0 = inlined_call_operand.hbm [shape: f32[16,768], index: 0, kind: input, shape index: {}]
  %s1 = inlined_call_operand.hbm [shape: f32[16,768], index: 1, kind: output, shape index: {0}]
  %s2 = inlined_call_operand.hbm [shape: f32[16,768], index: 2, kind: output, shape index: {1}]
  %3 = xla_tuple %s1, %s2
  %s4 = sld [smem:[#allocation0]]
  $region49: #{tpu_custom_call.1} parent=0
    _
  %s6 = ssub.s32 1, %s4
  %s7 = scalar_select 0, %s6, %s4
  $region1: #{tpu_custom_call.1} parent=0
    #allocation4 [shape = 'u8[49152]{0}', space=vmem, size = 0xc000, scoped, tag = 'input window, operand 0']
    #allocation5 [shape = 's32[2]{0}', space=sflag, size = 0x8, scoped, tag = 'scoped memory for tpu_custom_call.1']
    #allocation6 [shape = 's32[2]{0}', space=sflag, size = 0x8, scoped, tag = 'scoped memory for tpu_custom_call.1']
    #allocation7 [shape = 'u8[49152]{0}', space=vmem, size = 0xc000, scoped, tag = 'output window, operand 0']
    #allocation8 [shape = 'u8[49152]{0}', space=vmem, size = 0xc000, scoped, tag = 'output window, operand 1']
    #allocation9 [shape = 's32[2]{0}', space=sflag, size = 0x8, scoped, tag = 'scoped memory for tpu_custom_call.1']
    %8 = vsyncpa [#allocation5], 0
    %s9 = scalar_lea.sflag [#allocation5], 1
    %10 = vsyncpa %s9, 0
    %11 = vsyncpa [#allocation6], 0
    %s12 = scalar_lea.sflag [#allocation6], 1
    %13 = vsyncpa %s12, 0
    %14 = vsyncpa [#allocation9], 0
    %s15 = scalar_lea.sflag [#allocation9], 1
    %16 = vsyncpa %s15, 0
    loop: start=0, step=1, limit=4
    $region2: #{tpu_custom_call.1} parent=1 // loop_pre_header
      _
    $region3: #{tpu_custom_call.1} parent=1 // loop_header
      %s18 = sphi 0, %s22
      %p19 = scmp.ge.s32.totalorder %s18, 4
      %s28 = sphi 0, %s30
      %s31 = sphi 0, %s28
      %s32 = sphi 0, %s31
      %s48 = sphi 0, %s32
      %s54 = sphi 0, %s56
      %s57 = sphi 0, %s54
      %s58 = sphi 0, %s57
      %s74 = sphi 0, %s58
      %s80 = sphi 0, %s82
      %s83 = sphi 0, %s80
      %s84 = sphi 0, %s83
      %s100 = sphi 0, %s84
    $region4: #{tpu_custom_call.1} parent=1 // loop_header_branch
      %21 = sbr.rel (%p19) target = $region8
    $region5: #{tpu_custom_call.1} parent=1 // loop_body
      %s23 = ssub.s32 %s18, 1
      %s24 = ssub.s32 %s18, 2
      %s25 = sadd.s32 %s18, 1
      %s26 = ssub.s32 %s18, %s25
      %p27 = scmp.eq.s32.totalorder %s26, 0
      %s29 = sadd.s32 %s28, 1
      %s30 = scalar_select %p27, %s28, %s29
      %p33 = pneg %p27
      %p34 = scmp.eq.s32.totalorder %s18, 1
      %p35 = por %p33, %p34
      %p36 = scmp.ne.s32.totalorder %s28, %s31
      %p37 = scmp.eq.s32.totalorder %s18, 0
      %p38 = por %p36, %p37
      %p39 = scmp.ne.s32.totalorder %s28, %s31
      %p40 = scmp.eq.s32.totalorder %s23, 1
      %p41 = por %p39, %p40
      %p42 = scmp.ne.s32.totalorder %s31, %s32
      %p43 = scmp.eq.s32.totalorder %s23, 0
      %p44 = por %p42, %p43
      %p45 = scmp.ne.s32.totalorder %s31, %s32
      %p46 = scmp.eq.s32.totalorder %s24, 1
      %p47 = por %p45, %p46
      %p49 = scmp.ne.s32.totalorder %s32, %s48
      %p50 = scmp.eq.s32.totalorder %s24, 0
      %p51 = por %p49, %p50
      %s52 = ssub.s32 %s18, %s25
      %p53 = scmp.eq.s32.totalorder %s52, 0
      %s55 = sadd.s32 %s54, 1
      %s56 = scalar_select %p53, %s54, %s55
      %p59 = pneg %p53
      %p60 = scmp.eq.s32.totalorder %s18, 1
      %p61 = por %p59, %p60
      %p62 = scmp.ne.s32.totalorder %s54, %s57
      %p63 = scmp.eq.s32.totalorder %s18, 0
      %p64 = por %p62, %p63
      %p65 = scmp.ne.s32.totalorder %s54, %s57
      %p66 = scmp.eq.s32.totalorder %s23, 1
      %p67 = por %p65, %p66
      %p68 = scmp.ne.s32.totalorder %s57, %s58
      %p69 = scmp.eq.s32.totalorder %s23, 0
      %p70 = por %p68, %p69
      %p71 = scmp.ne.s32.totalorder %s57, %s58
      %p72 = scmp.eq.s32.totalorder %s24, 1
      %p73 = por %p71, %p72
      %p75 = scmp.ne.s32.totalorder %s58, %s74
      %p76 = scmp.eq.s32.totalorder %s24, 0
      %p77 = por %p75, %p76
      %s78 = ssub.s32 %s18, %s25
      %p79 = scmp.eq.s32.totalorder %s78, 0
      %s81 = sadd.s32 %s80, 1
      %s82 = scalar_select %p79, %s80, %s81
      %p85 = pneg %p79
      %p86 = scmp.eq.s32.totalorder %s18, 1
      %p87 = por %p85, %p86
      %p88 = scmp.ne.s32.totalorder %s80, %s83
      %p89 = scmp.eq.s32.totalorder %s18, 0
      %p90 = por %p88, %p89
      %p91 = scmp.ne.s32.totalorder %s80, %s83
      %p92 = scmp.eq.s32.totalorder %s23, 1
      %p93 = por %p91, %p92
      %p94 = scmp.ne.s32.totalorder %s83, %s84
      %p95 = scmp.eq.s32.totalorder %s23, 0
      %p96 = por %p94, %p95
      %p97 = scmp.ne.s32.totalorder %s83, %s84
      %p98 = scmp.eq.s32.totalorder %s24, 1
      %p99 = por %p97, %p98
      %p101 = scmp.ne.s32.totalorder %s84, %s100
      %p102 = scmp.eq.s32.totalorder %s24, 0
      %p103 = por %p101, %p102
      %p104 = scmp.le.s32.totalorder 1, %s18
      %p105 = scmp.lt.s32.totalorder %s18, 3
      %p106 = pnand %p104, %p105
      %p107 = pneg %p106
      // Predicated region
      $region9: #{tpu_custom_call.1} parent=5 // pred_check
        _
      $region10: #{tpu_custom_call.1} parent=5 // pred_check_branch
        %109 = sbr.rel (%p106) target = $region12
      $region11: #{tpu_custom_call.1} parent=5 // pred_region
        %s110 = ssub.s32 %s18, 1
      $region12: #{tpu_custom_call.1} parent=5 // pred_fallthru
        _
      %p111 = scmp.lt.s32.totalorder %s18, 2
      // Predicated region
      $region13: #{tpu_custom_call.1} parent=5 // pred_check
        %p112 = pneg %p111
      $region14: #{tpu_custom_call.1} parent=5 // pred_check_branch
        %114 = sbr.rel (%p112) target = $region16
      $region15: #{tpu_custom_call.1} parent=5 // pred_region
        // Predicated region
        $region17: #{tpu_custom_call.1} parent=15 // pred_check
          %p115 = pneg %p38
        $region18: #{tpu_custom_call.1} parent=15 // pred_check_branch
          %117 = sbr.rel (%p115) target = $region20
        $region19: #{tpu_custom_call.1} parent=15 // pred_region
          %s118 = sand.u32 %s28, 1
          %s119 = scalar_lea.sflag [#allocation5], %s118
          %s120 = sand.u32 %s28, 1
          %s121 = smul.addr %s120, 48
          %s122 = scalar_lea.vmem [#allocation4], %s121
          %s124 = ssub.s32 768, 768
          %125 = vsyncadd %s119, %s124
          %s126 = smul.addr %s18, 6
          %s127 = smul.addr %s126, 128
          %s128 = scalar_lea.hbm %s0, %s127
          %s130 = sshll.u32 %s122, 4
          %s131 = int_to_ptr.vmem [resolvable:$true] %s130
          %133 = dma.hbm_to_vmem [thread:$0]  %s128, 768, %s131, %s119
        $region20: #{tpu_custom_call.1} parent=15 // pred_fallthru
          _
      $region16: #{tpu_custom_call.1} parent=5 // pred_fallthru
        _
      %p134 = scmp.le.s32.totalorder 1, %s18
      %p135 = scmp.lt.s32.totalorder %s18, 3
      %p136 = pnand %p134, %p135
      %p137 = pneg %p136
      // Predicated region
      $region21: #{tpu_custom_call.1} parent=5 // pred_check
        _
      $region22: #{tpu_custom_call.1} parent=5 // pred_check_branch
        %139 = sbr.rel (%p136) target = $region24
      $region23: #{tpu_custom_call.1} parent=5 // pred_region
        %s140 = ssub.s32 %s18, 1
        %s141 = sand.u32 %s31, 1
        %s142 = scalar_lea.sflag [#allocation5], %s141
        %s143 = sand.u32 %s31, 1
        %s144 = smul.addr %s143, 48
        %s145 = scalar_lea.vmem [#allocation4], %s144
        // Predicated region
        $region25: #{tpu_custom_call.1} parent=23 // pred_check
          %p146 = pneg %p44
        $region26: #{tpu_custom_call.1} parent=23 // pred_check_branch
          %148 = sbr.rel (%p146) target = $region28
        $region27: #{tpu_custom_call.1} parent=23 // pred_region
          %149 = dma.done %s142, 768
        $region28: #{tpu_custom_call.1} parent=23 // pred_fallthru
          _
        %s150 = sand.u32 %s31, 1
        %s151 = scalar_lea.sflag [#allocation5], %s150
        %s152 = sand.u32 %s31, 1
        %s153 = smul.addr %s152, 48
        %s154 = scalar_lea.vmem [#allocation4], %s153
        %p155 = pneg %p44
        %p156 = pneg %p41
        %p157 = pneg %p70
        %p158 = pneg %p67
        %s159 = sand.u32 %s57, 1
        %s160 = scalar_lea.sflag [#allocation6], %s159
        %s161 = sand.u32 %s57, 1
        %s162 = smul.addr %s161, 48
        %s163 = scalar_lea.vmem [#allocation7], %s162
        %p164 = pneg %p96
        %p165 = pneg %p93
        %s166 = sand.u32 %s83, 1
        %s167 = scalar_lea.sflag [#allocation9], %s166
        %s168 = sand.u32 %s83, 1
        %s169 = smul.addr %s168, 48
        %s170 = scalar_lea.vmem [#allocation8], %s169
        %v171 = vld [vmem:[%s145] sm:$0xff]
        %v172 = vld [vmem:[%s145 + $0x8] sm:$0xff]
        %v173 = vld [vmem:[%s145 + $0x10] sm:$0xff]
        %v174 = vld [vmem:[%s145 + $0x18] sm:$0xff]
        %v175 = vld [vmem:[%s145 + $0x20] sm:$0xff]
        %v176 = vld [vmem:[%s145 + $0x28] sm:$0xff]
        %177 = vst [vmem:[#allocation2 + $0x8] sm:$0xff] %v171
        %178 = vst [vmem:[#allocation2 + $0x10] sm:$0xff] %v172
        %179 = vst [vmem:[#allocation2 + $0x18] sm:$0xff] %v173
        %180 = vst [vmem:[#allocation2 + $0x20] sm:$0xff] %v174
        %181 = vst [vmem:[#allocation2 + $0x28] sm:$0xff] %v175
        %182 = vst [vmem:[#allocation2 + $0x30] sm:$0xff] %v176
        %v183 = vld [vmem:[%s145] sm:$0xff]
        %v184 = vld [vmem:[%s145 + $0x28] sm:$0xff]
        %186 = vrot.lane.b32.xlu0 %v183, 8
        %v187 = vpop.permute.xlu0 %186
        %189 = vrot.lane.b32.xlu0 %v183, 16
        %v190 = vpop.permute.xlu0 %189
        %192 = vrot.lane.b32.xlu0 %v183, 24
        %v193 = vpop.permute.xlu0 %192
        %195 = vrot.lane.b32.xlu0 %v183, 32
        %v196 = vpop.permute.xlu0 %195
        %198 = vrot.lane.b32.xlu0 %v183, 40
        %v199 = vpop.permute.xlu0 %198
        %201 = vrot.lane.b32.xlu0 %v183, 48
        %v202 = vpop.permute.xlu0 %201
        %204 = vrot.lane.b32.xlu0 %v183, 56
        %v205 = vpop.permute.xlu0 %204
        %207 = vrot.lane.b32.xlu0 %v183, 64
        %v208 = vpop.permute.xlu0 %207
        %210 = vrot.lane.b32.xlu0 %v183, 72
        %v211 = vpop.permute.xlu0 %210
        %213 = vrot.lane.b32.xlu0 %v183, 80
        %v214 = vpop.permute.xlu0 %213
        %216 = vrot.lane.b32.xlu0 %v183, 88
        %v217 = vpop.permute.xlu0 %216
        %219 = vrot.lane.b32.xlu0 %v183, 96
        %v220 = vpop.permute.xlu0 %219
        %222 = vrot.lane.b32.xlu0 %v183, 104
        %v223 = vpop.permute.xlu0 %222
        %225 = vrot.lane.b32.xlu0 %v183, 112
        %v226 = vpop.permute.xlu0 %225
        %228 = vrot.lane.b32.xlu0 %v183, 120
        %v229 = vpop.permute.xlu0 %228
        %vm231 = vcmask 64512
        %v232 = vsel %vm231, %v183, %v187
        %vm233 = vcmask 130048
        %v234 = vsel %vm233, %v232, %v190
        %vm235 = vcmask 195584
        %v236 = vsel %vm235, %v234, %v193
        %vm237 = vcmask 261120
        %v238 = vsel %vm237, %v236, %v196
        %vm239 = vcmask 326656
        %v240 = vsel %vm239, %v238, %v199
        %vm241 = vcmask 392192
        %v242 = vsel %vm241, %v240, %v202
        %vm243 = vcmask 457728
        %v244 = vsel %vm243, %v242, %v205
        %vm245 = vcmask 523264
        %v246 = vsel %vm245, %v244, %v208
        %vm247 = vcmask 588800
        %v248 = vsel %vm247, %v246, %v211
        %vm249 = vcmask 654336
        %v250 = vsel %vm249, %v248, %v214
        %vm251 = vcmask 719872
        %v252 = vsel %vm251, %v250, %v217
        %vm253 = vcmask 785408
        %v254 = vsel %vm253, %v252, %v220
        %vm255 = vcmask 850944
        %v256 = vsel %vm255, %v254, %v223
        %vm257 = vcmask 916480
        %v258 = vsel %vm257, %v256, %v226
        %vm259 = vcmask 982016
        %v260 = vsel %vm259, %v258, %v229
        %261 = vst [vmem:[#allocation2] sm:$0xff] %v260
        %263 = vrot.lane.b32.xlu0 %v184, 8
        %v264 = vpop.permute.xlu0 %263
        %266 = vrot.lane.b32.xlu0 %v184, 16
        %v267 = vpop.permute.xlu0 %266
        %269 = vrot.lane.b32.xlu0 %v184, 24
        %v270 = vpop.permute.xlu0 %269
        %272 = vrot.lane.b32.xlu0 %v184, 32
        %v273 = vpop.permute.xlu0 %272
        %275 = vrot.lane.b32.xlu0 %v184, 40
        %v276 = vpop.permute.xlu0 %275
        %278 = vrot.lane.b32.xlu0 %v184, 48
        %v279 = vpop.permute.xlu0 %278
        %281 = vrot.lane.b32.xlu0 %v184, 56
        %v282 = vpop.permute.xlu0 %281
        %284 = vrot.lane.b32.xlu0 %v184, 64
        %v285 = vpop.permute.xlu0 %284
        %287 = vrot.lane.b32.xlu0 %v184, 72
        %v288 = vpop.permute.xlu0 %287
        %290 = vrot.lane.b32.xlu0 %v184, 80
        %v291 = vpop.permute.xlu0 %290
        %293 = vrot.lane.b32.xlu0 %v184, 88
        %v294 = vpop.permute.xlu0 %293
        %296 = vrot.lane.b32.xlu0 %v184, 96
        %v297 = vpop.permute.xlu0 %296
        %v299 = vsel %vm231, %v264, %v267
        %v300 = vsel %vm233, %v299, %v270
        %v301 = vsel %vm235, %v300, %v273
        %v302 = vsel %vm237, %v301, %v276
        %v303 = vsel %vm239, %v302, %v279
        %v304 = vsel %vm241, %v303, %v282
        %v305 = vsel %vm243, %v304, %v285
        %v306 = vsel %vm245, %v305, %v288
        %v307 = vsel %vm247, %v306, %v291
        %v308 = vsel %vm249, %v307, %v294
        %v309 = vsel %vm251, %v308, %v297
        %310 = vst.msk [vmem:[#allocation2 + $0x38] sm:$0xff] %vm253, %v309
        %v311 = vld [vmem:[#allocation2] sm:$0xff]
        %v312 = vld [vmem:[#allocation2 + $0x8] sm:$0xff]
        %v313 = vld [vmem:[#allocation2 + $0x10] sm:$0xff]
        %v314 = vld [vmem:[#allocation2 + $0x18] sm:$0xff]
        %v315 = vld [vmem:[#allocation2 + $0x20] sm:$0xff]
        %v316 = vld [vmem:[#allocation2 + $0x28] sm:$0xff]
        %v317 = vld [vmem:[#allocation2 + $0x30] sm:$0xff]
        %v318 = vld [vmem:[#allocation2 + $0x38] sm:$0xff]
        %327 = vrot.lane.b32.xlu0 %v311, 96
        %v328 = vpop.permute.xlu0 %327
        %329 = vrot.lane.b32.xlu0 %v312, 96
        %v330 = vpop.permute.xlu0 %329
        %331 = vrot.lane.b32.xlu0 %v313, 96
        %v332 = vpop.permute.xlu0 %331
        %333 = vrot.lane.b32.xlu0 %v314, 96
        %v334 = vpop.permute.xlu0 %333
        %335 = vrot.lane.b32.xlu0 %v315, 96
        %v336 = vpop.permute.xlu0 %335
        %337 = vrot.lane.b32.xlu0 %v316, 96
        %v338 = vpop.permute.xlu0 %337
        %339 = vrot.lane.b32.xlu0 %v317, 96
        %v340 = vpop.permute.xlu0 %339
        %341 = vrot.lane.b32.xlu0 %v318, 96
        %v342 = vpop.permute.xlu0 %341
        %v343 = vsel %vm253, %v328, %v330
        %v344 = vsel %vm253, %v330, %v332
        %v345 = vsel %vm253, %v332, %v334
        %v346 = vsel %vm253, %v334, %v336
        %v347 = vsel %vm253, %v336, %v338
        %v348 = vsel %vm253, %v338, %v340
        %v349 = vsel %vm253, %v340, %v342
        %v358 = vadd.f32 %v311, %v343
        %v359 = vadd.f32 %v312, %v344
        %v360 = vadd.f32 %v313, %v345
        %v361 = vadd.f32 %v314, %v346
        %v362 = vadd.f32 %v315, %v347
        %v363 = vadd.f32 %v316, %v348
        %v364 = vadd.f32 %v317, %v349
        %v365 = vadd.f32 %v318, %v342
        %366 = vrot.lane.b32.xlu0 %v311, 120
        %v367 = vpop.permute.xlu0 %366
        %368 = vrot.lane.b32.xlu0 %v312, 120
        %v369 = vpop.permute.xlu0 %368
        %370 = vrot.lane.b32.xlu0 %v313, 120
        %v371 = vpop.permute.xlu0 %370
        %372 = vrot.lane.b32.xlu0 %v314, 120
        %v373 = vpop.permute.xlu0 %372
        %374 = vrot.lane.b32.xlu0 %v315, 120
        %v375 = vpop.permute.xlu0 %374
        %376 = vrot.lane.b32.xlu0 %v316, 120
        %v377 = vpop.permute.xlu0 %376
        %378 = vrot.lane.b32.xlu0 %v317, 120
        %v379 = vpop.permute.xlu0 %378
        %380 = vrot.lane.b32.xlu0 %v318, 120
        %v381 = vpop.permute.xlu0 %380
        %v382 = vsel %vm259, %v367, %v369
        %v383 = vsel %vm259, %v369, %v371
        %v384 = vsel %vm259, %v371, %v373
        %v385 = vsel %vm259, %v373, %v375
        %v386 = vsel %vm259, %v375, %v377
        %v387 = vsel %vm259, %v377, %v379
        %v388 = vsel %vm259, %v379, %v381
        %v397 = vadd.f32 %v358, %v382
        %v398 = vadd.f32 %v359, %v383
        %v399 = vadd.f32 %v360, %v384
        %v400 = vadd.f32 %v361, %v385
        %v401 = vadd.f32 %v362, %v386
        %v402 = vadd.f32 %v363, %v387
        %v403 = vadd.f32 %v364, %v388
        %v404 = vadd.f32 %v365, %v381
        %v405 = vadd.f32 %v311, %v382
        %v406 = vadd.f32 %v312, %v383
        %v407 = vadd.f32 %v313, %v384
        %v408 = vadd.f32 %v314, %v385
        %v409 = vadd.f32 %v315, %v386
        %v410 = vadd.f32 %v316, %v387
        %v411 = vadd.f32 %v317, %v388
        %v412 = vadd.f32 %v318, %v381
        %421 = vrot.lane.b32.xlu0 %v405, 112
        %v422 = vpop.permute.xlu0 %421
        %423 = vrot.lane.b32.xlu0 %v406, 112
        %v424 = vpop.permute.xlu0 %423
        %425 = vrot.lane.b32.xlu0 %v407, 112
        %v426 = vpop.permute.xlu0 %425
        %427 = vrot.lane.b32.xlu0 %v408, 112
        %v428 = vpop.permute.xlu0 %427
        %429 = vrot.lane.b32.xlu0 %v409, 112
        %v430 = vpop.permute.xlu0 %429
        %431 = vrot.lane.b32.xlu0 %v410, 112
        %v432 = vpop.permute.xlu0 %431
        %433 = vrot.lane.b32.xlu0 %v411, 112
        %v434 = vpop.permute.xlu0 %433
        %435 = vrot.lane.b32.xlu0 %v412, 112
        %v436 = vpop.permute.xlu0 %435
        %v437 = vsel %vm257, %v422, %v424
        %v438 = vsel %vm257, %v424, %v426
        %v439 = vsel %vm257, %v426, %v428
        %v440 = vsel %vm257, %v428, %v430
        %v441 = vsel %vm257, %v430, %v432
        %v442 = vsel %vm257, %v432, %v434
        %v443 = vsel %vm257, %v434, %v436
        %v452 = vadd.f32 %v397, %v437
        %v453 = vadd.f32 %v398, %v438
        %v454 = vadd.f32 %v399, %v439
        %v455 = vadd.f32 %v400, %v440
        %v456 = vadd.f32 %v401, %v441
        %v457 = vadd.f32 %v402, %v442
        %v458 = vadd.f32 %v403, %v443
        %v459 = vadd.f32 %v404, %v436
        %468 = vrot.lane.b32.xlu0 %v452, 96
        %v469 = vpop.permute.xlu0 %468
        %470 = vrot.lane.b32.xlu0 %v453, 96
        %v471 = vpop.permute.xlu0 %470
        %472 = vrot.lane.b32.xlu0 %v454, 96
        %v473 = vpop.permute.xlu0 %472
        %474 = vrot.lane.b32.xlu0 %v455, 96
        %v475 = vpop.permute.xlu0 %474
        %476 = vrot.lane.b32.xlu0 %v456, 96
        %v477 = vpop.permute.xlu0 %476
        %478 = vrot.lane.b32.xlu0 %v457, 96
        %v479 = vpop.permute.xlu0 %478
        %480 = vrot.lane.b32.xlu0 %v458, 96
        %v481 = vpop.permute.xlu0 %480
        %482 = vrot.lane.b32.xlu0 %v459, 96
        %v483 = vpop.permute.xlu0 %482
        %v484 = vsel %vm253, %v469, %v471
        %v485 = vsel %vm253, %v471, %v473
        %v486 = vsel %vm253, %v473, %v475
        %v487 = vsel %vm253, %v475, %v477
        %v488 = vsel %vm253, %v477, %v479
        %v489 = vsel %vm253, %v479, %v481
        %v490 = vsel %vm253, %v481, %v483
        %499 = vst [vmem:[#allocation3] sm:$0xff] %v484
        %500 = vst [vmem:[#allocation3 + $0x8] sm:$0xff] %v485
        %501 = vst [vmem:[#allocation3 + $0x10] sm:$0xff] %v486
        %502 = vst [vmem:[#allocation3 + $0x18] sm:$0xff] %v487
        %503 = vst [vmem:[#allocation3 + $0x20] sm:$0xff] %v488
        %504 = vst [vmem:[#allocation3 + $0x28] sm:$0xff] %v489
        %505 = vst [vmem:[#allocation3 + $0x30] sm:$0xff] %v490
        %506 = vst.msk [vmem:[#allocation3 + $0x38] sm:$0xff] %vm237, %v483
        %v507 = vld [vmem:[#allocation3] sm:$0xff]
        %v508 = vld [vmem:[#allocation3 + $0x8] sm:$0xff]
        %v509 = vld [vmem:[#allocation3 + $0x10] sm:$0xff]
        %v510 = vld [vmem:[#allocation3 + $0x18] sm:$0xff]
        %v511 = vld [vmem:[#allocation3 + $0x20] sm:$0xff]
        %v512 = vld [vmem:[#allocation3 + $0x28] sm:$0xff]
        %v513 = vld [vmem:[#allocation3 + $0x30] sm:$0xff]
        %v514 = vld [vmem:[#allocation3 + $0x8] sm:$0xff]
        %v515 = vld [vmem:[#allocation3 + $0x10] sm:$0xff]
        %v516 = vld [vmem:[#allocation3 + $0x18] sm:$0xff]
        %v517 = vld [vmem:[#allocation3 + $0x20] sm:$0xff]
        %v518 = vld [vmem:[#allocation3 + $0x28] sm:$0xff]
        %v519 = vld [vmem:[#allocation3 + $0x30] sm:$0xff]
        %v520 = vld [vmem:[#allocation3 + $0x38] sm:$0xff]
        %528 = vrot.lane.b32.xlu0 %v514, 96
        %v529 = vpop.permute.xlu0 %528
        %530 = vrot.lane.b32.xlu0 %v515, 96
        %v531 = vpop.permute.xlu0 %530
        %532 = vrot.lane.b32.xlu0 %v516, 96
        %v533 = vpop.permute.xlu0 %532
        %534 = vrot.lane.b32.xlu0 %v517, 96
        %v535 = vpop.permute.xlu0 %534
        %536 = vrot.lane.b32.xlu0 %v518, 96
        %v537 = vpop.permute.xlu0 %536
        %538 = vrot.lane.b32.xlu0 %v519, 96
        %v539 = vpop.permute.xlu0 %538
        %540 = vrot.lane.b32.xlu0 %v520, 96
        %v541 = vpop.permute.xlu0 %540
        %v542 = vsel %vm253, %v529, %v531
        %v543 = vsel %vm253, %v531, %v533
        %v544 = vsel %vm253, %v533, %v535
        %v545 = vsel %vm253, %v535, %v537
        %v546 = vsel %vm253, %v537, %v539
        %v547 = vsel %vm253, %v539, %v541
        %v554 = vadd.f32 %v507, %v542
        %v555 = vadd.f32 %v508, %v543
        %v556 = vadd.f32 %v509, %v544
        %v557 = vadd.f32 %v510, %v545
        %v558 = vadd.f32 %v511, %v546
        %v559 = vadd.f32 %v512, %v547
        %567 = vrot.lane.b32.xlu0 %v507, 88
        %v568 = vpop.permute.xlu0 %567
        %569 = vrot.lane.b32.xlu0 %v508, 88
        %v570 = vpop.permute.xlu0 %569
        %571 = vrot.lane.b32.xlu0 %v509, 88
        %v572 = vpop.permute.xlu0 %571
        %573 = vrot.lane.b32.xlu0 %v510, 88
        %v574 = vpop.permute.xlu0 %573
        %575 = vrot.lane.b32.xlu0 %v511, 88
        %v576 = vpop.permute.xlu0 %575
        %577 = vrot.lane.b32.xlu0 %v512, 88
        %v578 = vpop.permute.xlu0 %577
        %579 = vrot.lane.b32.xlu0 %v513, 88
        %v580 = vpop.permute.xlu0 %579
        %v581 = vsel %vm251, %v568, %v570
        %v582 = vsel %vm251, %v570, %v572
        %v583 = vsel %vm251, %v572, %v574
        %v584 = vsel %vm251, %v574, %v576
        %v585 = vsel %vm251, %v576, %v578
        %v586 = vsel %vm251, %v578, %v580
        %v593 = vadd.f32 %v554, %v581
        %v594 = vadd.f32 %v555, %v582
        %v595 = vadd.f32 %v556, %v583
        %v596 = vadd.f32 %v557, %v584
        %v597 = vadd.f32 %v558, %v585
        %v598 = vadd.f32 %v559, %v586
        %v600 = vadd.f32 %v507, %v581
        %v601 = vadd.f32 %v508, %v582
        %v602 = vadd.f32 %v509, %v583
        %v603 = vadd.f32 %v510, %v584
        %v604 = vadd.f32 %v511, %v585
        %v605 = vadd.f32 %v512, %v586
        %v606 = vadd.f32 %v513, %v580
        %614 = vrot.lane.b32.xlu0 %v600, 48
        %v615 = vpop.permute.xlu0 %614
        %616 = vrot.lane.b32.xlu0 %v601, 48
        %v617 = vpop.permute.xlu0 %616
        %618 = vrot.lane.b32.xlu0 %v602, 48
        %v619 = vpop.permute.xlu0 %618
        %620 = vrot.lane.b32.xlu0 %v603, 48
        %v621 = vpop.permute.xlu0 %620
        %622 = vrot.lane.b32.xlu0 %v604, 48
        %v623 = vpop.permute.xlu0 %622
        %624 = vrot.lane.b32.xlu0 %v605, 48
        %v625 = vpop.permute.xlu0 %624
        %626 = vrot.lane.b32.xlu0 %v606, 48
        %v627 = vpop.permute.xlu0 %626
        %v628 = vsel %vm241, %v615, %v617
        %v629 = vsel %vm241, %v617, %v619
        %v630 = vsel %vm241, %v619, %v621
        %v631 = vsel %vm241, %v621, %v623
        %v632 = vsel %vm241, %v623, %v625
        %v633 = vsel %vm241, %v625, %v627
        %v640 = vadd.f32 %v593, %v628
        %v641 = vadd.f32 %v594, %v629
        %v642 = vadd.f32 %v595, %v630
        %v643 = vadd.f32 %v596, %v631
        %v644 = vadd.f32 %v597, %v632
        %v645 = vadd.f32 %v598, %v633
        %v646 = vmul.f32 %v640, 0.04
        %v647 = vmul.f32 %v641, 0.04
        %v648 = vmul.f32 %v642, 0.04
        %v649 = vmul.f32 %v643, 0.04
        %v650 = vmul.f32 %v644, 0.04
        %v651 = vmul.f32 %v645, 0.04
        %652 = vst [vmem:[%s170] sm:$0xff] %v646
        %653 = vst [vmem:[%s170 + $0x8] sm:$0xff] %v647
        %654 = vst [vmem:[%s170 + $0x10] sm:$0xff] %v648
        %655 = vst [vmem:[%s170 + $0x18] sm:$0xff] %v649
        %656 = vst [vmem:[%s170 + $0x20] sm:$0xff] %v650
        %657 = vst [vmem:[%s170 + $0x28] sm:$0xff] %v651
        %v658 = vld [vmem:[#allocation2 + $0x8] sm:$0xff]
        %v659 = vld [vmem:[#allocation2 + $0x10] sm:$0xff]
        %v660 = vld [vmem:[#allocation2 + $0x18] sm:$0xff]
        %v661 = vld [vmem:[#allocation2 + $0x20] sm:$0xff]
        %v662 = vld [vmem:[#allocation2 + $0x28] sm:$0xff]
        %v663 = vld [vmem:[#allocation2 + $0x30] sm:$0xff]
        %v664 = vsub.f32 %v658, %v646
        %v665 = vsub.f32 %v659, %v647
        %v666 = vsub.f32 %v660, %v648
        %v667 = vsub.f32 %v661, %v649
        %v668 = vsub.f32 %v662, %v650
        %v669 = vsub.f32 %v663, %v651
        %670 = vst [vmem:[%s163] sm:$0xff] %v664
        %671 = vst [vmem:[%s163 + $0x8] sm:$0xff] %v665
        %672 = vst [vmem:[%s163 + $0x10] sm:$0xff] %v666
        %673 = vst [vmem:[%s163 + $0x18] sm:$0xff] %v667
        %674 = vst [vmem:[%s163 + $0x20] sm:$0xff] %v668
        %675 = vst [vmem:[%s163 + $0x28] sm:$0xff] %v669
        %s676 = sand.u32 %s57, 1
        %s677 = scalar_lea.sflag [#allocation6], %s676
        %s678 = sand.u32 %s57, 1
        %s679 = smul.addr %s678, 48
        %s680 = scalar_lea.vmem [#allocation7], %s679
        %s681 = sand.u32 %s83, 1
        %s682 = scalar_lea.sflag [#allocation9], %s681
        %s683 = sand.u32 %s83, 1
        %s684 = smul.addr %s683, 48
        %s685 = scalar_lea.vmem [#allocation8], %s684
        // Predicated region
        $region29: #{tpu_custom_call.1} parent=23 // pred_check
          %p686 = pneg %p67
        $region30: #{tpu_custom_call.1} parent=23 // pred_check_branch
          %688 = sbr.rel (%p686) target = $region32
        $region31: #{tpu_custom_call.1} parent=23 // pred_region
          %s690 = ssub.s32 768, 768
          %691 = vsyncadd %s677, %s690
          %s692 = smul.addr %s23, 6
          %s693 = smul.addr %s692, 128
          %s694 = scalar_lea.hbm %s1, %s693
          %s696 = sshll.u32 %s680, 4
          %s697 = int_to_ptr.vmem [resolvable:$true] %s696
          %699 = dma.vmem_to_hbm [thread:$0]  %s697, 768, %s694, %s677
        $region32: #{tpu_custom_call.1} parent=23 // pred_fallthru
          _
        // Predicated region
        $region33: #{tpu_custom_call.1} parent=23 // pred_check
          %p700 = pneg %p93
        $region34: #{tpu_custom_call.1} parent=23 // pred_check_branch
          %702 = sbr.rel (%p700) target = $region36
        $region35: #{tpu_custom_call.1} parent=23 // pred_region
          %s704 = ssub.s32 768, 768
          %705 = vsyncadd %s682, %s704
          %s706 = smul.addr %s23, 6
          %s707 = smul.addr %s706, 128
          %s708 = scalar_lea.hbm %s2, %s707
          %s710 = sshll.u32 %s685, 4
          %s711 = int_to_ptr.vmem [resolvable:$true] %s710
          %713 = dma.vmem_to_hbm [thread:$0]  %s711, 768, %s708, %s682
        $region36: #{tpu_custom_call.1} parent=23 // pred_fallthru
          _
      $region24: #{tpu_custom_call.1} parent=5 // pred_fallthru
        _
      %p714 = scmp.le.s32.totalorder 2, %s18
      // Predicated region
      $region37: #{tpu_custom_call.1} parent=5 // pred_check
        %p715 = pneg %p714
      $region38: #{tpu_custom_call.1} parent=5 // pred_check_branch
        %717 = sbr.rel (%p715) target = $region40
      $region39: #{tpu_custom_call.1} parent=5 // pred_region
        %s718 = ssub.s32 %s18, 2
        // Predicated region
        $region41: #{tpu_custom_call.1} parent=39 // pred_check
          %p719 = pneg %p73
        $region42: #{tpu_custom_call.1} parent=39 // pred_check_branch
          %721 = sbr.rel (%p719) target = $region44
        $region43: #{tpu_custom_call.1} parent=39 // pred_region
          %s722 = sand.u32 %s58, 1
          %s723 = scalar_lea.sflag [#allocation6], %s722
          %s724 = sand.u32 %s58, 1
          %s725 = smul.addr %s724, 48
          %s726 = scalar_lea.vmem [#allocation7], %s725
          %727 = dma.done %s723, 768
        $region44: #{tpu_custom_call.1} parent=39 // pred_fallthru
          _
        // Predicated region
        $region45: #{tpu_custom_call.1} parent=39 // pred_check
          %p728 = pneg %p99
        $region46: #{tpu_custom_call.1} parent=39 // pred_check_branch
          %730 = sbr.rel (%p728) target = $region48
        $region47: #{tpu_custom_call.1} parent=39 // pred_region
          %s731 = sand.u32 %s84, 1
          %s732 = scalar_lea.sflag [#allocation9], %s731
          %s733 = sand.u32 %s84, 1
          %s734 = smul.addr %s733, 48
          %s735 = scalar_lea.vmem [#allocation8], %s734
          %736 = dma.done %s732, 768
        $region48: #{tpu_custom_call.1} parent=39 // pred_fallthru
          _
      $region40: #{tpu_custom_call.1} parent=5 // pred_fallthru
        _
    $region6: #{tpu_custom_call.1} parent=1 // loop_footer
      %s22 = sadd.s32 1, %s18
    $region7: #{tpu_custom_call.1} parent=1 // loop_footer_branch
      %17 = sbr.rel target = $region3
    $region8: #{tpu_custom_call.1} parent=1 // loop_exit
      _
    %737 = vsyncpa [#allocation5], 1
    %s738 = scalar_lea.sflag [#allocation5], 1
    %739 = vsyncpa %s738, 1
    %740 = vsyncpa [#allocation6], 1
    %s741 = scalar_lea.sflag [#allocation6], 1
    %742 = vsyncpa %s741, 1
    %743 = vsyncpa [#allocation9], 1
    %s744 = scalar_lea.sflag [#allocation9], 1
    %745 = vsyncpa %s744, 1

</llo_original>
